<compile_context>
chip_gen: v6e
topology: v6e:2x2x1
jax: 0.10.0
libtpu: 0.0.40
codegen_flags: <defaults>
</compile_context>

<pallas_src>
import functools

import jax
import jax.numpy as jnp
from jax.experimental import pallas as pl
from jax.experimental.pallas import tpu as pltpu

NUM_CLASSES = 8  # hard-coded in the PyTorch module (torch.zeros(N, 8))


def _static_pow(x, gamma):
    """x ** gamma with gamma known at trace time.

    Integer gamma -> plain VPU multiplies (no EUP exp/log round trip)."""
    g = float(gamma)
    if g.is_integer() and 0 <= g <= 16:
        gi = int(g)
        if gi == 0:
            return jnp.ones_like(x)
        acc = x
        for _ in range(gi - 1):
            acc = acc * x
        return acc
    return jnp.power(x, g)


def _floss_kernel(logits_ref, labels_ref, *refs, gamma, use_neg):
    if use_neg:
        neg_ref, out_ref = refs
    else:
        (out_ref,) = refs

    logits = logits_ref[...].astype(jnp.float32)          # (C, TN)
    c, tn = logits.shape

    # log-softmax over the class (sublane) axis
    m = jnp.max(logits, axis=0, keepdims=True)             # (1, TN)
    shifted = logits - m                                    # (C, TN)
    e = jnp.exp(shifted)                                    # 8 exp / row
    s = jnp.sum(e, axis=0, keepdims=True)                   # (1, TN)
    inv_s = pl.reciprocal(s, approx=False)                  # (1, TN)
    logp = shifted - jnp.log(s)                             # 1 log / row

    # one-hot "scatter_" of the labels (labels on the lane axis)
    labels = labels_ref[...]                                # (1, TN) int32
    class_ids = jax.lax.broadcasted_iota(jnp.int32, (c, tn), 0)
    one_hot = (class_ids == labels).astype(jnp.float32)     # (C, TN)

    # select the label class first, then apply the focal factor once per row
    logp_label = jnp.sum(logp * one_hot, axis=0, keepdims=True)      # (1, TN)
    p_label = jnp.sum(e * one_hot, axis=0, keepdims=True) * inv_s    # (1, TN)
    loss = _static_pow(1.0 - p_label, gamma) * logp_label            # (1, TN)

    if use_neg:
        p0 = e[0:1, :] * inv_s                                        # probs[:, 0]
        loss_neg = (_static_pow(1.0 - p0, gamma) * neg_ref[...]
                    * jnp.log(1.0 - p0 + 1e-07))
        loss = loss + loss_neg

    out_ref[...] = -loss                                              # lane-dense store


def floss(logits, labels, gamma, neg_idx=None, *, tile_lanes=8192):
    """Pallas implementation of FLoss.forward.

    logits:  [N, 8] float
    labels:  [N]    int   (class indices in [0, 8))
    neg_idx: [N]    float or None
    returns: [N]    float32
    """
    n, c = logits.shape
    assert c == NUM_CLASSES, "FLoss hard-codes 8 classes"
    assert tile_lanes % 128 == 0

    use_neg = neg_idx is not None

    # lane tile: multiple of 128, no larger than the (padded) batch
    tl = min(tile_lanes, max(128, ((n + 127) // 128) * 128))
    n_pad = pl.cdiv(n, tl) * tl
    pad = n_pad - n

    # transpose to class-on-sublane / batch-on-lane, pad batch to tile multiple
    logits_t = jnp.pad(logits.astype(jnp.float32).T, ((0, 0), (0, pad)))   # (8, n_pad)
    labels_2d = jnp.pad(labels.astype(jnp.int32), (0, pad)).reshape(1, n_pad)

    in_specs = [
        pl.BlockSpec((c, tl), lambda i: (0, i)),
        pl.BlockSpec((1, tl), lambda i: (0, i)),
    ]
    args = [logits_t, labels_2d]
    if use_neg:
        neg_2d = jnp.pad(neg_idx.astype(jnp.float32), (0, pad)).reshape(1, n_pad)
        in_specs.append(pl.BlockSpec((1, tl), lambda i: (0, i)))
        args.append(neg_2d)

    kernel = functools.partial(_floss_kernel, gamma=float(gamma), use_neg=use_neg)

    out = pl.pallas_call(
        kernel,
        out_shape=jax.ShapeDtypeStruct((1, n_pad), jnp.float32),
        grid_spec=pltpu.PrefetchScalarGridSpec(
            num_scalar_prefetch=0,
            grid=(n_pad // tl,),
            in_specs=in_specs,
            out_specs=pl.BlockSpec((1, tl), lambda i: (0, i)),
        ),
        compiler_params=pltpu.CompilerParams(
            dimension_semantics=("parallel",)),
    )(*args)
    return out[0, :n]


def _floss_ref(logits, labels, gamma, neg_idx=None):
    probs = jax.nn.softmax(logits.astype(jnp.float32), axis=1)
    one_hot = jax.nn.one_hot(labels, NUM_CLASSES, dtype=jnp.float32)
    loss_pos = jnp.power(1.0 - probs, gamma) * one_hot * jnp.log(probs)
    loss = jnp.sum(loss_pos, axis=1)
    if neg_idx is not None:
        p0 = probs[:, 0]
        loss = loss + jnp.power(1.0 - p0, gamma) * neg_idx * jnp.log(1.0 - p0 + 1e-07)
    return -loss


if __name__ == "__main__":
    key = jax.random.PRNGKey(0)
    k1, k2, k3 = jax.random.split(key, 3)

    N = 16
    gamma = 2.0
    logits = jax.random.normal(k1, (N, NUM_CLASSES), dtype=jnp.float32)
    labels = jax.random.randint(k2, (N,), 0, NUM_CLASSES, dtype=jnp.int32)
    neg_idx = jax.random.bernoulli(k3, 0.5, (N,)).astype(jnp.float32)

    # path without neg_idx
    out1 = jax.block_until_ready(floss(logits, labels, gamma))
    ref1 = _floss_ref(logits, labels, gamma)
    assert jnp.allclose(out1, ref1, atol=1e-5, rtol=1e-5)

    # path with neg_idx
    out2 = jax.block_until_ready(floss(logits, labels, gamma, neg_idx))
    ref2 = _floss_ref(logits, labels, gamma, neg_idx)
    assert jnp.allclose(out2, ref2, atol=1e-5, rtol=1e-5)

    print("KERNEL_OK")
</pallas_src>

<mosaic_0001>
module attributes {stable_mosaic.version = 11 : i64} {
  func.func @_floss_kernel(%arg0: i32, %arg1: memref<8x128xf32, #tpu.memory_space<vmem>>, %arg2: memref<1x128xi32, #tpu.memory_space<vmem>>, %arg3: memref<1x128xf32, #tpu.memory_space<vmem>>) attributes {dimension_semantics = [#tpu.dimension_semantics<parallel>], iteration_bounds = array<i64: 1>, scalar_prefetch = 0 : i64, scratch_operands = 0 : i64, tpu.core_type = #tpu.core_type<tc>, window_params = [{transform_indices = @transform_0, window_bounds = array<i64: 8, 128>}, {transform_indices = @transform_1, window_bounds = array<i64: 1, 128>}, {transform_indices = @transform_2, window_bounds = array<i64: 1, 128>}]} {
    %c0 = arith.constant 0 : index
    %c0_0 = arith.constant 0 : index
    %0 = vector.load %arg1[%c0, %c0_0] : memref<8x128xf32, #tpu.memory_space<vmem>>, vector<8x128xf32>
    %cst = arith.constant dense<0xFF800000> : vector<128xf32>
    %1 = vector.multi_reduction <maximumf>, %0, %cst [0] : vector<8x128xf32> to vector<128xf32>
    %2 = vector.shape_cast %1 : vector<128xf32> to vector<1x128xf32>
    %3 = vector.broadcast %2 : vector<1x128xf32> to vector<8x128xf32>
    %4 = arith.subf %0, %3 : vector<8x128xf32>
    %5 = math.exp %4 : vector<8x128xf32>
    %cst_1 = arith.constant dense<0.000000e+00> : vector<128xf32>
    %6 = vector.multi_reduction <add>, %5, %cst_1 [0] : vector<8x128xf32> to vector<128xf32>
    %7 = vector.shape_cast %6 : vector<128xf32> to vector<1x128xf32>
    %8 = tpu.reciprocal %7 : vector<1x128xf32> -> vector<1x128xf32>
    %9 = math.log %7 : vector<1x128xf32>
    %10 = vector.broadcast %9 : vector<1x128xf32> to vector<8x128xf32>
    %11 = arith.subf %4, %10 : vector<8x128xf32>
    %c0_2 = arith.constant 0 : index
    %c0_3 = arith.constant 0 : index
    %12 = vector.load %arg2[%c0_2, %c0_3] : memref<1x128xi32, #tpu.memory_space<vmem>>, vector<1x128xi32>
    %13 = tpu.iota {dimensions = array<i32: 0>} : vector<8x128xi32>
    %14 = vector.broadcast %12 : vector<1x128xi32> to vector<8x128xi32>
    %15 = arith.cmpi eq, %13, %14 : vector<8x128xi32>
    %16 = arith.extui %15 : vector<8x128xi1> to vector<8x128xi32>
    %17 = arith.sitofp %16 : vector<8x128xi32> to vector<8x128xf32>
    %18 = arith.mulf %11, %17 : vector<8x128xf32>
    %cst_4 = arith.constant dense<0.000000e+00> : vector<128xf32>
    %19 = vector.multi_reduction <add>, %18, %cst_4 [0] : vector<8x128xf32> to vector<128xf32>
    %20 = vector.shape_cast %19 : vector<128xf32> to vector<1x128xf32>
    %21 = arith.mulf %5, %17 : vector<8x128xf32>
    %cst_5 = arith.constant dense<0.000000e+00> : vector<128xf32>
    %22 = vector.multi_reduction <add>, %21, %cst_5 [0] : vector<8x128xf32> to vector<128xf32>
    %23 = vector.shape_cast %22 : vector<128xf32> to vector<1x128xf32>
    %24 = arith.mulf %23, %8 : vector<1x128xf32>
    %cst_6 = arith.constant 1.000000e+00 : f32
    %25 = vector.broadcast %cst_6 : f32 to vector<1x128xf32>
    %26 = arith.subf %25, %24 : vector<1x128xf32>
    %27 = arith.mulf %26, %26 : vector<1x128xf32>
    %28 = arith.mulf %27, %20 : vector<1x128xf32>
    %cst_7 = arith.constant 0.000000e+00 : f32
    %29 = vector.broadcast %cst_7 : f32 to vector<1x128xf32>
    %30 = arith.subf %29, %28 : vector<1x128xf32>
    %c0_8 = arith.constant 0 : index
    %c0_9 = arith.constant 0 : index
    %31 = vector.load %arg3[%c0_8, %c0_9] : memref<1x128xf32, #tpu.memory_space<vmem>>, vector<1x128xf32>
    tpu.vector_store %arg3[%c0_8, %c0_9], %30 {strides = array<i32>} : memref<1x128xf32, #tpu.memory_space<vmem>>, vector<1x128xf32>,
    return
  }
  func.func @transform_0(%arg0: i32) -> (i32, i32) {
    %c0_i32 = arith.constant 0 : i32
    %c0_i32_0 = arith.constant 0 : i32
    return %c0_i32, %arg0 : i32, i32
  }
  func.func @transform_1(%arg0: i32) -> (i32, i32) {
    %c0_i32 = arith.constant 0 : i32
    %c0_i32_0 = arith.constant 0 : i32
    return %c0_i32, %arg0 : i32, i32
  }
  func.func @transform_2(%arg0: i32) -> (i32, i32) {
    %c0_i32 = arith.constant 0 : i32
    %c0_i32_0 = arith.constant 0 : i32
    return %c0_i32, %arg0 : i32, i32
  }
}

</mosaic_0001>

<llo_original>
// kernel: tpu_custom_call.1
$region0: #{tpu_custom_call.1}
  #allocation0 [shape = 'u32[]', space=smem, size = 0x4, offset = 0x4, fixed_abs, tag = 'smem constant byte address 0x4 - core index']
  #allocation1 [shape = 'u32[144,128]{1,0:T(1,128)}', space=vmem, size = 0x12000, scoped, tag = 'internal scratch']
  %s0 = inlined_call_operand.hbm [shape: f32[8,128], index: 0, kind: input, shape index: {}]
  %s1 = inlined_call_operand.vmem [shape: s32[1,128], index: 1, kind: input, shape index: {}]
  %s2 = inlined_call_operand.hbm [shape: f32[1,128], index: 2, kind: output, shape index: {}]
  %s3 = sld [smem:[#allocation0]]
  $region22: #{tpu_custom_call.1} parent=0
    _
  %s5 = ssub.s32 1, %s3
  %s6 = scalar_select 0, %s5, %s3
  $region1: #{tpu_custom_call.1} parent=0
    #allocation2 [shape = 'u8[4096]{0}', space=vmem, size = 0x1000, scoped, tag = 'input window, operand 0, single buffered']
    #allocation3 [shape = 's32[1]{0}', space=sflag, size = 0x4, scoped, tag = 'scoped memory for tpu_custom_call.1']
    #allocation4 [shape = 's32[1]{0}', space=sflag, size = 0x4, scoped, tag = 'scoped memory for tpu_custom_call.1']
    #allocation5 [shape = 'u8[512]{0}', space=vmem, size = 0x400, scoped, tag = 'output window, operand 0, single buffered']
    %7 = vsyncpa [#allocation3], 0
    %8 = vsyncpa [#allocation4], 0
    // Predicated region
    $region2: #{tpu_custom_call.1} parent=1 // pred_check
      _
    $region3: #{tpu_custom_call.1} parent=1 // pred_check_branch
      %10 = sbr.rel (0) target = $region5
    $region4: #{tpu_custom_call.1} parent=1 // pred_region
      %s12 = ssub.s32 128, 128
      %13 = vsyncadd [#allocation3], %s12
      %s15 = sshll.u32 [#allocation2], 4
      %s16 = int_to_ptr.vmem [resolvable:$true] %s15
      %18 = dma.hbm_to_vmem [thread:$0]  %s0, 128, %s16, [#allocation3]
    $region5: #{tpu_custom_call.1} parent=1 // pred_fallthru
      _
    // Predicated region
    $region6: #{tpu_custom_call.1} parent=1 // pred_check
      _
    $region7: #{tpu_custom_call.1} parent=1 // pred_check_branch
      %20 = sbr.rel (0) target = $region9
    $region8: #{tpu_custom_call.1} parent=1 // pred_region
      _
    $region9: #{tpu_custom_call.1} parent=1 // pred_fallthru
      _
    // Predicated region
    $region10: #{tpu_custom_call.1} parent=1 // pred_check
      _
    $region11: #{tpu_custom_call.1} parent=1 // pred_check_branch
      %22 = sbr.rel (0) target = $region13
    $region12: #{tpu_custom_call.1} parent=1 // pred_region
      %23 = dma.done [#allocation3], 128
    $region13: #{tpu_custom_call.1} parent=1 // pred_fallthru
      _
    %v24 = vld [vmem:[#allocation2] sm:$0xff]
    %v25 = vrot.slane %v24, 4
    %v26 = vmax.f32 %v24, %v25
    %v27 = vrot.slane %v26, 2
    %v28 = vmax.f32 %v26, %v27
    %v29 = vrot.slane %v28, 1
    %v30 = vmax.f32 %v28, %v29
    %v31 = vsub.f32 %v24, %v30
    %v32 = vmul.f32 %v31, 1.442695
    %v33 = vpow.pop %v32
    %v34 = vrot.slane %v33, 4
    %v35 = vadd.f32 %v33, %v34
    %v36 = vrot.slane %v35, 2
    %v37 = vadd.f32 %v35, %v36
    %v38 = vrot.slane %v37, 1
    %v39 = vadd.f32 %v37, %v38
    %v40 = vrcp.pop %v39
    %v41 = vlog2.pop %v39
    %v42 = vmul.f32 %v41, 0.6931472
    %v43 = vsub.f32 %v31, %v42
    %v44 = vld [vmem:[%s1] sm:$0x1]
    %v45 = vlaneseq
    %v46 = vshrl.u32 %v45, 7
    %v47 = vlaneseq
    %v48 = vshrl.u32 %v47, 7
    %v49 = vsub.s32 0, %v48
    %v50 = vrot.slane %v44, %v49
    %vm51 = vcmp.eq.s32.totalorder %v46, %v50
    %v52 = vsel %vm51, 1, 0
    %v53 = vcvt.s32.f32 %v52
    %v54 = vmul.f32 %v43, %v53
    %v55 = vrot.slane %v54, 4
    %v56 = vadd.f32 %v54, %v55
    %v57 = vrot.slane %v56, 2
    %v58 = vadd.f32 %v56, %v57
    %v59 = vrot.slane %v58, 1
    %v60 = vadd.f32 %v58, %v59
    %v61 = vmul.f32 %v33, %v53
    %v62 = vrot.slane %v61, 4
    %v63 = vadd.f32 %v61, %v62
    %v64 = vrot.slane %v63, 2
    %v65 = vadd.f32 %v63, %v64
    %v66 = vrot.slane %v65, 1
    %v67 = vadd.f32 %v65, %v66
    %v68 = vmul.f32 %v67, %v40
    %v69 = vsub.f32 1.0, %v68
    %v70 = vmul.f32 %v69, %v69
    %v71 = vmul.f32 %v70, %v60
    %v72 = vsub.f32 0.0, %v71
    %73 = vst [vmem:[#allocation5] sm:$0x1] %v72
    // Predicated region
    $region14: #{tpu_custom_call.1} parent=1 // pred_check
      _
    $region15: #{tpu_custom_call.1} parent=1 // pred_check_branch
      %75 = sbr.rel (0) target = $region17
    $region16: #{tpu_custom_call.1} parent=1 // pred_region
      %s77 = ssub.s32 16, 16
      %78 = vsyncadd [#allocation4], %s77
      %s80 = sshll.u32 [#allocation5], 4
      %s81 = int_to_ptr.vmem [resolvable:$true] %s80
      %83 = dma.vmem_to_hbm [thread:$0]  %s81, 16, %s2, [#allocation4]
    $region17: #{tpu_custom_call.1} parent=1 // pred_fallthru
      _
    // Predicated region
    $region18: #{tpu_custom_call.1} parent=1 // pred_check
      _
    $region19: #{tpu_custom_call.1} parent=1 // pred_check_branch
      %85 = sbr.rel (0) target = $region21
    $region20: #{tpu_custom_call.1} parent=1 // pred_region
      %86 = dma.done [#allocation4], 16
    $region21: #{tpu_custom_call.1} parent=1 // pred_fallthru
      _
    %87 = vsyncpa [#allocation3], 1
    %88 = vsyncpa [#allocation4], 1

</llo_original>
